<compile_context>
chip_gen: v7x
topology: tpu7x:2x2x1
jax: 0.10.0
libtpu: 0.0.40
codegen_flags: <defaults>
</compile_context>

<pallas_src>
import jax
import jax.numpy as jnp
from jax.experimental import pallas as pl
from jax.experimental.pallas import tpu as pltpu


def _round_up(x, m):
    return (x + m - 1) // m * m


def _quad_cost_kernel(p_ref, a_ref, b_ref, o_ref, acc_ref):
    # p_ref: (1, TK)   a_ref: (TK, TM)   b_ref: (1, TM)
    # o_ref: (8, 128) partial-sum tile for this M block
    # acc_ref: (1, TM) f32 accumulator, resident across the K axis
    k = pl.program_id(1)

    @pl.when(k == 0)
    def _():
        acc_ref[...] = jnp.zeros_like(acc_ref)

    acc_ref[...] += jnp.dot(
        p_ref[...], a_ref[...], preferred_element_type=jnp.float32
    )

    @pl.when(k == pl.num_programs(1) - 1)
    def _():
        r = acc_ref[...] - b_ref[...].astype(jnp.float32)
        partial = jnp.sum(r * r)
        # Lane-dense (8,128) store; wrapper picks lane 0 of row 0 per M tile.
        o_ref[...] = jnp.broadcast_to(partial, o_ref.shape).astype(jnp.float32)


def quad_cost(params, A, b, *, tk_max=256, tm_max=512):
    """cost = sum((params @ A - b)**2), tiled/pipelined Pallas kernel."""
    one, N = params.shape
    Na, M = A.shape
    assert one == 1 and Na == N and b.shape == (1, M)

    # Lane-dense tiles: TK (params / A-sublane dim) and TM (A-lane / residual dim)
    # are multiples of 128; shapes are zero-padded up to tile multiples.
    TK = min(tk_max, _round_up(N, 128))
    TM = min(tm_max, _round_up(M, 128))
    N_pad = _round_up(N, TK)
    M_pad = _round_up(M, TM)

    p_p = jnp.pad(params.astype(jnp.float32), ((0, 0), (0, N_pad - N)))
    A_p = jnp.pad(A.astype(jnp.float32), ((0, N_pad - N), (0, M_pad - M)))
    b_p = jnp.pad(b.astype(jnp.float32), ((0, 0), (0, M_pad - M)))

    num_m = M_pad // TM
    num_k = N_pad // TK

    out = pl.pallas_call(
        _quad_cost_kernel,
        out_shape=jax.ShapeDtypeStruct((8, num_m * 128), jnp.float32),
        grid_spec=pltpu.PrefetchScalarGridSpec(
            num_scalar_prefetch=0,
            grid=(num_m, num_k),
            in_specs=[
                pl.BlockSpec((1, TK), lambda j, k: (0, k)),     # params row
                pl.BlockSpec((TK, TM), lambda j, k: (k, j)),    # A tile (the traffic)
                pl.BlockSpec((1, TM), lambda j, k: (0, j)),     # target row
            ],
            out_specs=pl.BlockSpec((8, 128), lambda j, k: (0, j)),
            scratch_shapes=[pltpu.VMEM((1, TM), jnp.float32)],
        ),
        compiler_params=pltpu.CompilerParams(
            dimension_semantics=("parallel", "arbitrary"),
            vmem_limit_bytes=32 * 1024 * 1024,
        ),
    )(p_p, A_p, b_p)

    # One partial per M tile lives at lane 0 of row 0 of each (8,128) out tile.
    return jnp.sum(out[0, 0::128])


class TorchInterface:
    """JAX/Pallas analogue of `_torch_interface`: holds params + args,
    forward() evaluates cost = func(params, *args)."""

    def __init__(self, func, paras_init, args):
        self._func = func
        self._args = args
        self._params = paras_init  # analogue of nn.Parameter

    def forward(self):
        return self._func(self._params, *self._args)


if __name__ == "__main__":
    key = jax.random.PRNGKey(0)

    def run_case(N, M, subkey):
        k_p, k_a, k_b = jax.random.split(subkey, 3)
        p0 = jax.random.normal(k_p, (1, N), dtype=jnp.float32)
        A = jax.random.normal(k_a, (N, M), dtype=jnp.float32)
        b = jax.random.normal(k_b, (1, M), dtype=jnp.float32)

        module = TorchInterface(quad_cost, p0, (A, b))
        cost = module.forward()
        jax.block_until_ready(cost)

        ref = jnp.sum((p0 @ A - b) ** 2)
        assert jnp.allclose(cost, ref, rtol=1e-4, atol=1e-3), (N, M, cost, ref)

    keys = jax.random.split(key, 3)
    run_case(256, 512, keys[0])    # tile-aligned, single-tile grid
    run_case(200, 300, keys[1])    # exercises zero-padding path
    run_case(512, 1024, keys[2])   # multi-tile grid on both axes

    print("KERNEL_OK")
</pallas_src>

<mosaic_0001>
module attributes {stable_mosaic.version = 11 : i64} {
  func.func @_quad_cost_kernel(%arg0: i32, %arg1: i32, %arg2: memref<1x256xf32, #tpu.memory_space<vmem>>, %arg3: memref<256x512xf32, #tpu.memory_space<vmem>>, %arg4: memref<1x512xf32, #tpu.memory_space<vmem>>, %arg5: memref<8x128xf32, #tpu.memory_space<vmem>>, %arg6: memref<1x512xf32, #tpu.memory_space<vmem>>) attributes {dimension_semantics = [#tpu.dimension_semantics<parallel>, #tpu.dimension_semantics<arbitrary>], iteration_bounds = array<i64: 1, 1>, scalar_prefetch = 0 : i64, scratch_operands = 1 : i64, tpu.core_type = #tpu.core_type<tc>, window_params = [{transform_indices = @transform_0, window_bounds = array<i64: 1, 256>}, {transform_indices = @transform_1, window_bounds = array<i64: 256, 512>}, {transform_indices = @transform_2, window_bounds = array<i64: 1, 512>}, {transform_indices = @transform_3, window_bounds = array<i64: 8, 128>}]} {
    %c0_i32 = arith.constant 0 : i32
    %0 = arith.cmpi eq, %arg1, %c0_i32 : i32
    %1 = arith.extui %0 : i1 to i32
    %c0_i32_0 = arith.constant 0 : i32
    %2 = arith.cmpi ne, %1, %c0_i32_0 : i32
    scf.if %2 {
      %cst_10 = arith.constant 0.000000e+00 : f32
      %12 = vector.broadcast %cst_10 : f32 to vector<1x512xf32>
      %c0_11 = arith.constant 0 : index
      %c0_12 = arith.constant 0 : index
      %13 = vector.load %arg6[%c0_11, %c0_12] : memref<1x512xf32, #tpu.memory_space<vmem>>, vector<1x512xf32>
      tpu.vector_store %arg6[%c0_11, %c0_12], %12 {strides = array<i32>} : memref<1x512xf32, #tpu.memory_space<vmem>>, vector<1x512xf32>,
    } else {
    }
    %c0 = arith.constant 0 : index
    %c0_1 = arith.constant 0 : index
    %3 = vector.load %arg6[%c0, %c0_1] : memref<1x512xf32, #tpu.memory_space<vmem>>, vector<1x512xf32>
    %c0_2 = arith.constant 0 : index
    %c0_3 = arith.constant 0 : index
    %4 = vector.load %arg2[%c0_2, %c0_3] : memref<1x256xf32, #tpu.memory_space<vmem>>, vector<1x256xf32>
    %c0_4 = arith.constant 0 : index
    %c0_5 = arith.constant 0 : index
    %5 = vector.load %arg3[%c0_4, %c0_5] : memref<256x512xf32, #tpu.memory_space<vmem>>, vector<256x512xf32>
    %cst = arith.constant dense<0.000000e+00> : vector<1x512xf32>
    %6 = tpu.matmul %4, %5, %cst {dimension_numbers = #tpu.dot_dimension_numbers<[1], [0], [0], [1], [0, 0, 1, 1], [], []>} : vector<1x256xf32>, vector<256x512xf32>, vector<1x512xf32> -> vector<1x512xf32>
    %7 = arith.addf %3, %6 : vector<1x512xf32>
    %c0_6 = arith.constant 0 : index
    %c0_7 = arith.constant 0 : index
    %8 = vector.load %arg6[%c0_6, %c0_7] : memref<1x512xf32, #tpu.memory_space<vmem>>, vector<1x512xf32>
    tpu.vector_store %arg6[%c0_6, %c0_7], %7 {strides = array<i32>} : memref<1x512xf32, #tpu.memory_space<vmem>>, vector<1x512xf32>,
    %c0_i32_8 = arith.constant 0 : i32
    %9 = arith.cmpi eq, %arg1, %c0_i32_8 : i32
    %10 = arith.extui %9 : i1 to i32
    %c0_i32_9 = arith.constant 0 : i32
    %11 = arith.cmpi ne, %10, %c0_i32_9 : i32
    scf.if %11 {
      %c0_10 = arith.constant 0 : index
      %c0_11 = arith.constant 0 : index
      %12 = vector.load %arg6[%c0_10, %c0_11] : memref<1x512xf32, #tpu.memory_space<vmem>>, vector<1x512xf32>
      %c0_12 = arith.constant 0 : index
      %c0_13 = arith.constant 0 : index
      %13 = vector.load %arg4[%c0_12, %c0_13] : memref<1x512xf32, #tpu.memory_space<vmem>>, vector<1x512xf32>
      %14 = arith.subf %12, %13 : vector<1x512xf32>
      %15 = arith.mulf %14, %14 : vector<1x512xf32>
      %16 = vector.shape_cast %15 : vector<1x512xf32> to vector<1x1x512xf32>
      %cst_14 = arith.constant dense<0.000000e+00> : vector<1xf32>
      %17 = vector.multi_reduction <add>, %16, %cst_14 [1, 2] : vector<1x1x512xf32> to vector<1xf32>
      %18 = vector.shape_cast %17 : vector<1xf32> to vector<1x1x1xf32>
      %19 = vector.extract %18[0, 0, 0] : f32 from vector<1x1x1xf32>
      %20 = vector.broadcast %19 : f32 to vector<8x128xf32>
      %c0_15 = arith.constant 0 : index
      %c0_16 = arith.constant 0 : index
      %21 = vector.load %arg5[%c0_15, %c0_16] : memref<8x128xf32, #tpu.memory_space<vmem>>, vector<8x128xf32>
      tpu.vector_store %arg5[%c0_15, %c0_16], %20 {strides = array<i32>} : memref<8x128xf32, #tpu.memory_space<vmem>>, vector<8x128xf32>,
    } else {
    }
    return
  }
  func.func @transform_0(%arg0: i32, %arg1: i32) -> (i32, i32) {
    %c0_i32 = arith.constant 0 : i32
    %c0_i32_0 = arith.constant 0 : i32
    return %c0_i32, %arg1 : i32, i32
  }
  func.func @transform_1(%arg0: i32, %arg1: i32) -> (i32, i32) {
    %c0_i32 = arith.constant 0 : i32
    return %arg1, %arg0 : i32, i32
  }
  func.func @transform_2(%arg0: i32, %arg1: i32) -> (i32, i32) {
    %c0_i32 = arith.constant 0 : i32
    %c0_i32_0 = arith.constant 0 : i32
    return %c0_i32, %arg0 : i32, i32
  }
  func.func @transform_3(%arg0: i32, %arg1: i32) -> (i32, i32) {
    %c0_i32 = arith.constant 0 : i32
    %c0_i32_0 = arith.constant 0 : i32
    return %c0_i32, %arg0 : i32, i32
  }
}

</mosaic_0001>

<llo_original>
// kernel: tpu_custom_call.1
$region0: #{tpu_custom_call.1}
  #allocation0 [shape = 'u32[]', space=smem, size = 0x4, offset = 0x4, fixed_abs, tag = 'smem constant byte address 0x4 - core index']
  #allocation1 [shape = 'u32[144,128]{1,0:T(1,128)}', space=vmem, size = 0x12000, scoped, tag = 'internal scratch']
  #allocation2 [shape = 'f32[1,512]{1,0:T(1,128)}', space=vmem, size = 0x800, scoped, tag = 'scratch operand']
  %s0 = inlined_call_operand.hbm [shape: f32[1,256], index: 0, kind: input, shape index: {}]
  %s1 = inlined_call_operand.hbm [shape: f32[256,512], index: 1, kind: input, shape index: {}]
  %s2 = inlined_call_operand.vmem [shape: f32[1,512], index: 2, kind: input, shape index: {}]
  %s3 = inlined_call_operand.hbm [shape: f32[8,128], index: 3, kind: output, shape index: {}]
  %s4 = sld [smem:[#allocation0]]
  $region38: #{tpu_custom_call.1} parent=0
    _
  %s6 = ssub.s32 1, %s4
  %s7 = scalar_select 0, %s6, %s4
  $region1: #{tpu_custom_call.1} parent=0
    #allocation3 [shape = 'u8[1024]{0}', space=vmem, size = 0x400, scoped, tag = 'input window, operand 0, single buffered']
    #allocation4 [shape = 's32[1]{0}', space=sflag, size = 0x4, scoped, tag = 'scoped memory for tpu_custom_call.1']
    #allocation5 [shape = 's32[1]{0}', space=sflag, size = 0x4, scoped, tag = 'scoped memory for tpu_custom_call.1']
    #allocation6 [shape = 'u8[524288]{0}', space=vmem, size = 0x80000, scoped, tag = 'input window, operand 1, single buffered']
    #allocation7 [shape = 's32[1]{0}', space=sflag, size = 0x4, scoped, tag = 'scoped memory for tpu_custom_call.1']
    #allocation8 [shape = 'u8[4096]{0}', space=vmem, size = 0x1000, scoped, tag = 'output window, operand 0, single buffered']
    %8 = vsyncpa [#allocation4], 0
    %9 = vsyncpa [#allocation7], 0
    %10 = vsyncpa [#allocation5], 0
    // Predicated region
    $region2: #{tpu_custom_call.1} parent=1 // pred_check
      _
    $region3: #{tpu_custom_call.1} parent=1 // pred_check_branch
      %12 = sbr.rel (0) target = $region5
    $region4: #{tpu_custom_call.1} parent=1 // pred_region
      %s14 = ssub.s32 32, 32
      %15 = vsyncadd [#allocation4], %s14
      %s17 = sshll.u32 [#allocation3], 4
      %s18 = int_to_ptr.vmem [resolvable:$true] %s17
      %20 = dma.hbm_to_vmem [thread:$0]  %s0, 32, %s18, [#allocation4]
    $region5: #{tpu_custom_call.1} parent=1 // pred_fallthru
      _
    // Predicated region
    $region6: #{tpu_custom_call.1} parent=1 // pred_check
      _
    $region7: #{tpu_custom_call.1} parent=1 // pred_check_branch
      %22 = sbr.rel (0) target = $region9
    $region8: #{tpu_custom_call.1} parent=1 // pred_region
      %s24 = ssub.s32 16384, 16384
      %25 = vsyncadd [#allocation7], %s24
      %s26 = sshll.u32 [#allocation6], 4
      %s27 = int_to_ptr.vmem [resolvable:$true] %s26
      %32 = dma.hbm_to_vmem [thread:$0]  %s1, 16384, %s27, [#allocation7], 512, 512, 32
    $region9: #{tpu_custom_call.1} parent=1 // pred_fallthru
      _
    // Predicated region
    $region10: #{tpu_custom_call.1} parent=1 // pred_check
      _
    $region11: #{tpu_custom_call.1} parent=1 // pred_check_branch
      %34 = sbr.rel (0) target = $region13
    $region12: #{tpu_custom_call.1} parent=1 // pred_region
      _
    $region13: #{tpu_custom_call.1} parent=1 // pred_fallthru
      _
    // Predicated region
    $region14: #{tpu_custom_call.1} parent=1 // pred_check
      _
    $region15: #{tpu_custom_call.1} parent=1 // pred_check_branch
      %36 = sbr.rel (0) target = $region17
    $region16: #{tpu_custom_call.1} parent=1 // pred_region
      %37 = dma.done [#allocation4], 32
    $region17: #{tpu_custom_call.1} parent=1 // pred_fallthru
      _
    // Predicated region
    $region18: #{tpu_custom_call.1} parent=1 // pred_check
      _
    $region19: #{tpu_custom_call.1} parent=1 // pred_check_branch
      %39 = sbr.rel (0) target = $region21
    $region20: #{tpu_custom_call.1} parent=1 // pred_region
      %40 = dma.done [#allocation7], 16384
    $region21: #{tpu_custom_call.1} parent=1 // pred_fallthru
      _
    %p41 = scmp.eq.s32.totalorder 0, 0
    // Predicated region
    $region22: #{tpu_custom_call.1} parent=1 // pred_check
      %p42 = pneg %p41
    $region23: #{tpu_custom_call.1} parent=1 // pred_check_branch
      %44 = sbr.rel (%p42) target = $region25
    $region24: #{tpu_custom_call.1} parent=1 // pred_region
      %v45 = vlaneseq
      %vm46 = vcmp.ge.s32.totalorder %v45, 0
      %vm47 = vcmp.lt.s32.totalorder %v45, 512
      %vm48 = vmand %vm46, %vm47
      %49 = vst.msk [vmem:[#allocation2] sm:$0xf] %vm48, 0.0
    $region25: #{tpu_custom_call.1} parent=1 // pred_fallthru
      _
    %v50 = vld [vmem:[#allocation2] sm:$0xf]
    %v51 = vld [vmem:[#allocation3] sm:$0x3]
    %v52 = vld [vmem:[#allocation6] sm:$0xff]
    %v53 = vld [vmem:[#allocation6 + $0x8] sm:$0xff]
    %v54 = vld [vmem:[#allocation6 + $0x10] sm:$0xff]
    %v55 = vld [vmem:[#allocation6 + $0x18] sm:$0xff]
    %v56 = vld [vmem:[#allocation6 + $0x20] sm:$0xff]
    %v57 = vld [vmem:[#allocation6 + $0x28] sm:$0xff]
    %v58 = vld [vmem:[#allocation6 + $0x30] sm:$0xff]
    %v59 = vld [vmem:[#allocation6 + $0x38] sm:$0xff]
    %v60 = vld [vmem:[#allocation6 + $0x40] sm:$0xff]
    %v61 = vld [vmem:[#allocation6 + $0x48] sm:$0xff]
    %v62 = vld [vmem:[#allocation6 + $0x50] sm:$0xff]
    %v63 = vld [vmem:[#allocation6 + $0x58] sm:$0xff]
    %v64 = vld [vmem:[#allocation6 + $0x60] sm:$0xff]
    %v65 = vld [vmem:[#allocation6 + $0x68] sm:$0xff]
    %v66 = vld [vmem:[#allocation6 + $0x70] sm:$0xff]
    %v67 = vld [vmem:[#allocation6 + $0x78] sm:$0xff]
    %v68 = vld [vmem:[#allocation6 + $0x80] sm:$0xff]
    %v69 = vld [vmem:[#allocation6 + $0x88] sm:$0xff]
    %v70 = vld [vmem:[#allocation6 + $0x90] sm:$0xff]
    %v71 = vld [vmem:[#allocation6 + $0x98] sm:$0xff]
    %v72 = vld [vmem:[#allocation6 + $0xa0] sm:$0xff]
    %v73 = vld [vmem:[#allocation6 + $0xa8] sm:$0xff]
    %v74 = vld [vmem:[#allocation6 + $0xb0] sm:$0xff]
    %v75 = vld [vmem:[#allocation6 + $0xb8] sm:$0xff]
    %v76 = vld [vmem:[#allocation6 + $0xc0] sm:$0xff]
    %v77 = vld [vmem:[#allocation6 + $0xc8] sm:$0xff]
    %v78 = vld [vmem:[#allocation6 + $0xd0] sm:$0xff]
    %v79 = vld [vmem:[#allocation6 + $0xd8] sm:$0xff]
    %v80 = vld [vmem:[#allocation6 + $0xe0] sm:$0xff]
    %v81 = vld [vmem:[#allocation6 + $0xe8] sm:$0xff]
    %v82 = vld [vmem:[#allocation6 + $0xf0] sm:$0xff]
    %v83 = vld [vmem:[#allocation6 + $0xf8] sm:$0xff]
    %v84 = vld [vmem:[#allocation6 + $0x100] sm:$0xff]
    %v85 = vld [vmem:[#allocation6 + $0x108] sm:$0xff]
    %v86 = vld [vmem:[#allocation6 + $0x110] sm:$0xff]
    %v87 = vld [vmem:[#allocation6 + $0x118] sm:$0xff]
    %v88 = vld [vmem:[#allocation6 + $0x120] sm:$0xff]
    %v89 = vld [vmem:[#allocation6 + $0x128] sm:$0xff]
    %v90 = vld [vmem:[#allocation6 + $0x130] sm:$0xff]
    %v91 = vld [vmem:[#allocation6 + $0x138] sm:$0xff]
    %v92 = vld [vmem:[#allocation6 + $0x140] sm:$0xff]
    %v93 = vld [vmem:[#allocation6 + $0x148] sm:$0xff]
    %v94 = vld [vmem:[#allocation6 + $0x150] sm:$0xff]
    %v95 = vld [vmem:[#allocation6 + $0x158] sm:$0xff]
    %v96 = vld [vmem:[#allocation6 + $0x160] sm:$0xff]
    %v97 = vld [vmem:[#allocation6 + $0x168] sm:$0xff]
    %v98 = vld [vmem:[#allocation6 + $0x170] sm:$0xff]
    %v99 = vld [vmem:[#allocation6 + $0x178] sm:$0xff]
    %v100 = vld [vmem:[#allocation6 + $0x180] sm:$0xff]
    %v101 = vld [vmem:[#allocation6 + $0x188] sm:$0xff]
    %v102 = vld [vmem:[#allocation6 + $0x190] sm:$0xff]
    %v103 = vld [vmem:[#allocation6 + $0x198] sm:$0xff]
    %v104 = vld [vmem:[#allocation6 + $0x1a0] sm:$0xff]
    %v105 = vld [vmem:[#allocation6 + $0x1a8] sm:$0xff]
    %v106 = vld [vmem:[#allocation6 + $0x1b0] sm:$0xff]
    %v107 = vld [vmem:[#allocation6 + $0x1b8] sm:$0xff]
    %v108 = vld [vmem:[#allocation6 + $0x1c0] sm:$0xff]
    %v109 = vld [vmem:[#allocation6 + $0x1c8] sm:$0xff]
    %v110 = vld [vmem:[#allocation6 + $0x1d0] sm:$0xff]
    %v111 = vld [vmem:[#allocation6 + $0x1d8] sm:$0xff]
    %v112 = vld [vmem:[#allocation6 + $0x1e0] sm:$0xff]
    %v113 = vld [vmem:[#allocation6 + $0x1e8] sm:$0xff]
    %v114 = vld [vmem:[#allocation6 + $0x1f0] sm:$0xff]
    %v115 = vld [vmem:[#allocation6 + $0x1f8] sm:$0xff]
    %v116 = vld [vmem:[#allocation6 + $0x200] sm:$0xff]
    %v117 = vld [vmem:[#allocation6 + $0x208] sm:$0xff]
    %v118 = vld [vmem:[#allocation6 + $0x210] sm:$0xff]
    %v119 = vld [vmem:[#allocation6 + $0x218] sm:$0xff]
    %v120 = vld [vmem:[#allocation6 + $0x220] sm:$0xff]
    %v121 = vld [vmem:[#allocation6 + $0x228] sm:$0xff]
    %v122 = vld [vmem:[#allocation6 + $0x230] sm:$0xff]
    %v123 = vld [vmem:[#allocation6 + $0x238] sm:$0xff]
    %v124 = vld [vmem:[#allocation6 + $0x240] sm:$0xff]
    %v125 = vld [vmem:[#allocation6 + $0x248] sm:$0xff]
    %v126 = vld [vmem:[#allocation6 + $0x250] sm:$0xff]
    %v127 = vld [vmem:[#allocation6 + $0x258] sm:$0xff]
    %v128 = vld [vmem:[#allocation6 + $0x260] sm:$0xff]
    %v129 = vld [vmem:[#allocation6 + $0x268] sm:$0xff]
    %v130 = vld [vmem:[#allocation6 + $0x270] sm:$0xff]
    %v131 = vld [vmem:[#allocation6 + $0x278] sm:$0xff]
    %v132 = vld [vmem:[#allocation6 + $0x280] sm:$0xff]
    %v133 = vld [vmem:[#allocation6 + $0x288] sm:$0xff]
    %v134 = vld [vmem:[#allocation6 + $0x290] sm:$0xff]
    %v135 = vld [vmem:[#allocation6 + $0x298] sm:$0xff]
    %v136 = vld [vmem:[#allocation6 + $0x2a0] sm:$0xff]
    %v137 = vld [vmem:[#allocation6 + $0x2a8] sm:$0xff]
    %v138 = vld [vmem:[#allocation6 + $0x2b0] sm:$0xff]
    %v139 = vld [vmem:[#allocation6 + $0x2b8] sm:$0xff]
    %v140 = vld [vmem:[#allocation6 + $0x2c0] sm:$0xff]
    %v141 = vld [vmem:[#allocation6 + $0x2c8] sm:$0xff]
    %v142 = vld [vmem:[#allocation6 + $0x2d0] sm:$0xff]
    %v143 = vld [vmem:[#allocation6 + $0x2d8] sm:$0xff]
    %v144 = vld [vmem:[#allocation6 + $0x2e0] sm:$0xff]
    %v145 = vld [vmem:[#allocation6 + $0x2e8] sm:$0xff]
    %v146 = vld [vmem:[#allocation6 + $0x2f0] sm:$0xff]
    %v147 = vld [vmem:[#allocation6 + $0x2f8] sm:$0xff]
    %v148 = vld [vmem:[#allocation6 + $0x300] sm:$0xff]
    %v149 = vld [vmem:[#allocation6 + $0x308] sm:$0xff]
    %v150 = vld [vmem:[#allocation6 + $0x310] sm:$0xff]
    %v151 = vld [vmem:[#allocation6 + $0x318] sm:$0xff]
    %v152 = vld [vmem:[#allocation6 + $0x320] sm:$0xff]
    %v153 = vld [vmem:[#allocation6 + $0x328] sm:$0xff]
    %v154 = vld [vmem:[#allocation6 + $0x330] sm:$0xff]
    %v155 = vld [vmem:[#allocation6 + $0x338] sm:$0xff]
    %v156 = vld [vmem:[#allocation6 + $0x340] sm:$0xff]
    %v157 = vld [vmem:[#allocation6 + $0x348] sm:$0xff]
    %v158 = vld [vmem:[#allocation6 + $0x350] sm:$0xff]
    %v159 = vld [vmem:[#allocation6 + $0x358] sm:$0xff]
    %v160 = vld [vmem:[#allocation6 + $0x360] sm:$0xff]
    %v161 = vld [vmem:[#allocation6 + $0x368] sm:$0xff]
    %v162 = vld [vmem:[#allocation6 + $0x370] sm:$0xff]
    %v163 = vld [vmem:[#allocation6 + $0x378] sm:$0xff]
    %v164 = vld [vmem:[#allocation6 + $0x380] sm:$0xff]
    %v165 = vld [vmem:[#allocation6 + $0x388] sm:$0xff]
    %v166 = vld [vmem:[#allocation6 + $0x390] sm:$0xff]
    %v167 = vld [vmem:[#allocation6 + $0x398] sm:$0xff]
    %v168 = vld [vmem:[#allocation6 + $0x3a0] sm:$0xff]
    %v169 = vld [vmem:[#allocation6 + $0x3a8] sm:$0xff]
    %v170 = vld [vmem:[#allocation6 + $0x3b0] sm:$0xff]
    %v171 = vld [vmem:[#allocation6 + $0x3b8] sm:$0xff]
    %v172 = vld [vmem:[#allocation6 + $0x3c0] sm:$0xff]
    %v173 = vld [vmem:[#allocation6 + $0x3c8] sm:$0xff]
    %v174 = vld [vmem:[#allocation6 + $0x3d0] sm:$0xff]
    %v175 = vld [vmem:[#allocation6 + $0x3d8] sm:$0xff]
    %v176 = vld [vmem:[#allocation6 + $0x3e0] sm:$0xff]
    %v177 = vld [vmem:[#allocation6 + $0x3e8] sm:$0xff]
    %v178 = vld [vmem:[#allocation6 + $0x3f0] sm:$0xff]
    %v179 = vld [vmem:[#allocation6 + $0x3f8] sm:$0xff]
    %v181 = vlaneseq
    %v182 = vshrl.u32 %v181, 7
    %v183 = vsub.s32 0, %v182
    %v184 = vrot.slane %v51, %v183
    %v185 = vlaneseq
    %v186 = vshrl.u32 %v185, 7
    %v187 = vsub.s32 1, %v186
    %v188 = vrot.slane %v51, %v187
    %191 = vmatprep.subr.mxu0 %v53
    %192 = vmatpush1.msra.mxu0 %v52
    %193 = vmatprep.subr.mxu0 %v57
    %194 = vmatpush1.msra.mxu0 %v56
    %195 = vmatprep.subr.mxu0 %v61
    %196 = vmatpush1.msra.mxu0 %v60
    %197 = vmatprep.subr.mxu0 %v65
    %198 = vmatpush1.msra.mxu0 %v64
    %199 = vmatprep.subr.mxu0 %v69
    %200 = vmatpush1.msra.mxu0 %v68
    %201 = vmatprep.subr.mxu0 %v73
    %202 = vmatpush1.msra.mxu0 %v72
    %203 = vmatprep.subr.mxu0 %v77
    %204 = vmatpush1.msra.mxu0 %v76
    %205 = vmatprep.subr.mxu0 %v81
    %206 = vmatpush1.msra.mxu0 %v80
    %207 = vmatprep.subr.mxu0 %v85
    %208 = vmatpush1.msra.mxu0 %v84
    %209 = vmatprep.subr.mxu0 %v89
    %210 = vmatpush1.msra.mxu0 %v88
    %211 = vmatprep.subr.mxu0 %v93
    %212 = vmatpush1.msra.mxu0 %v92
    %213 = vmatprep.subr.mxu0 %v97
    %214 = vmatpush1.msra.mxu0 %v96
    %215 = vmatprep.subr.mxu0 %v101
    %216 = vmatpush1.msra.mxu0 %v100
    %217 = vmatprep.subr.mxu0 %v105
    %218 = vmatpush1.msra.mxu0 %v104
    %219 = vmatprep.subr.mxu0 %v109
    %220 = vmatpush1.msra.mxu0 %v108
    %221 = vmatprep.subr.mxu0 %v113
    %222 = vmatpush1.msra.mxu0 %v112
    %223 = vmatprep.subr.mxu0 %v117
    %224 = vmatpush1.msra.mxu0 %v116
    %225 = vmatprep.subr.mxu0 %v121
    %226 = vmatpush1.msra.mxu0 %v120
    %227 = vmatprep.subr.mxu0 %v125
    %228 = vmatpush1.msra.mxu0 %v124
    %229 = vmatprep.subr.mxu0 %v129
    %230 = vmatpush1.msra.mxu0 %v128
    %231 = vmatprep.subr.mxu0 %v133
    %232 = vmatpush1.msra.mxu0 %v132
    %233 = vmatprep.subr.mxu0 %v137
    %234 = vmatpush1.msra.mxu0 %v136
    %235 = vmatprep.subr.mxu0 %v141
    %236 = vmatpush1.msra.mxu0 %v140
    %237 = vmatprep.subr.mxu0 %v145
    %238 = vmatpush1.msra.mxu0 %v144
    %239 = vmatprep.subr.mxu0 %v149
    %240 = vmatpush1.msra.mxu0 %v148
    %241 = vmatprep.subr.mxu0 %v153
    %242 = vmatpush1.msra.mxu0 %v152
    %243 = vmatprep.subr.mxu0 %v157
    %244 = vmatpush1.msra.mxu0 %v156
    %245 = vmatprep.subr.mxu0 %v161
    %246 = vmatpush1.msra.mxu0 %v160
    %247 = vmatprep.subr.mxu0 %v165
    %248 = vmatpush1.msra.mxu0 %v164
    %249 = vmatprep.subr.mxu0 %v169
    %250 = vmatpush1.msra.mxu0 %v168
    %251 = vmatprep.subr.mxu0 %v173
    %252 = vmatpush1.msra.mxu0 %v172
    %253 = vmatprep.subr.mxu0 %v177
    %254 = vmatpush1.msra.mxu0 %v176
    %255 = vmatprep.mubr.f32.mxu0 %v188
    %256 = vmatmul.mubr.f32.gmra.mrb[0].mxu0 %v184
    %v257 = vpop.f32.mrb[0].mxu0
    %v258 = vadd.f32 0.0, %v257
    %v259 = vpop.f32.mrb[0].mxu0
    %v260 = vadd.f32 0.0, %v259
    %261 = vdwg.mxu0
    %262 = vmatprep.subr.mxu0 %v55
    %263 = vmatpush1.msra.mxu0 %v54
    %264 = vmatprep.subr.mxu0 %v59
    %265 = vmatpush1.msra.mxu0 %v58
    %266 = vmatprep.subr.mxu0 %v63
    %267 = vmatpush1.msra.mxu0 %v62
    %268 = vmatprep.subr.mxu0 %v67
    %269 = vmatpush1.msra.mxu0 %v66
    %270 = vmatprep.subr.mxu0 %v71
    %271 = vmatpush1.msra.mxu0 %v70
    %272 = vmatprep.subr.mxu0 %v75
    %273 = vmatpush1.msra.mxu0 %v74
    %274 = vmatprep.subr.mxu0 %v79
    %275 = vmatpush1.msra.mxu0 %v78
    %276 = vmatprep.subr.mxu0 %v83
    %277 = vmatpush1.msra.mxu0 %v82
    %278 = vmatprep.subr.mxu0 %v87
    %279 = vmatpush1.msra.mxu0 %v86
    %280 = vmatprep.subr.mxu0 %v91
    %281 = vmatpush1.msra.mxu0 %v90
    %282 = vmatprep.subr.mxu0 %v95
    %283 = vmatpush1.msra.mxu0 %v94
    %284 = vmatprep.subr.mxu0 %v99
    %285 = vmatpush1.msra.mxu0 %v98
    %286 = vmatprep.subr.mxu0 %v103
    %287 = vmatpush1.msra.mxu0 %v102
    %288 = vmatprep.subr.mxu0 %v107
    %289 = vmatpush1.msra.mxu0 %v106
    %290 = vmatprep.subr.mxu0 %v111
    %291 = vmatpush1.msra.mxu0 %v110
    %292 = vmatprep.subr.mxu0 %v115
    %293 = vmatpush1.msra.mxu0 %v114
    %294 = vmatprep.subr.mxu0 %v119
    %295 = vmatpush1.msra.mxu0 %v118
    %296 = vmatprep.subr.mxu0 %v123
    %297 = vmatpush1.msra.mxu0 %v122
    %298 = vmatprep.subr.mxu0 %v127
    %299 = vmatpush1.msra.mxu0 %v126
    %300 = vmatprep.subr.mxu0 %v131
    %301 = vmatpush1.msra.mxu0 %v130
    %302 = vmatprep.subr.mxu0 %v135
    %303 = vmatpush1.msra.mxu0 %v134
    %304 = vmatprep.subr.mxu0 %v139
    %305 = vmatpush1.msra.mxu0 %v138
    %306 = vmatprep.subr.mxu0 %v143
    %307 = vmatpush1.msra.mxu0 %v142
    %308 = vmatprep.subr.mxu0 %v147
    %309 = vmatpush1.msra.mxu0 %v146
    %310 = vmatprep.subr.mxu0 %v151
    %311 = vmatpush1.msra.mxu0 %v150
    %312 = vmatprep.subr.mxu0 %v155
    %313 = vmatpush1.msra.mxu0 %v154
    %314 = vmatprep.subr.mxu0 %v159
    %315 = vmatpush1.msra.mxu0 %v158
    %316 = vmatprep.subr.mxu0 %v163
    %317 = vmatpush1.msra.mxu0 %v162
    %318 = vmatprep.subr.mxu0 %v167
    %319 = vmatpush1.msra.mxu0 %v166
    %320 = vmatprep.subr.mxu0 %v171
    %321 = vmatpush1.msra.mxu0 %v170
    %322 = vmatprep.subr.mxu0 %v175
    %323 = vmatpush1.msra.mxu0 %v174
    %324 = vmatprep.subr.mxu0 %v179
    %325 = vmatpush1.msra.mxu0 %v178
    %326 = vmatprep.mubr.f32.mxu0 %v188
    %327 = vmatmul.mubr.f32.gmra.mrb[0].mxu0 %v184
    %v328 = vpop.f32.mrb[0].mxu0
    %v329 = vadd.f32 0.0, %v328
    %v330 = vpop.f32.mrb[0].mxu0
    %v331 = vadd.f32 0.0, %v330
    %332 = vdwg.mxu0
    %v337 = vcombine.low %v258, %v260
    %v338 = vcombine.low %v329, %v331
    %v340 = vunpack.c.l.s4 1966171168
    %v341 = vunpack.c.0.s8 %v340
    %v342 = vlaneseq
    %v343 = vshrl.u32 %v342, 7
    %v344 = vsub.s32 %v341, %v343
    %v345 = vrot.slane %v337, %v344
    %v347 = vunpack.c.l.s4 1966171168
    %v348 = vunpack.c.0.s8 %v347
    %v349 = vlaneseq
    %v350 = vshrl.u32 %v349, 7
    %v351 = vsub.s32 %v348, %v350
    %v352 = vrot.slane %v338, %v351
    %v353 = vcombine.low %v345, %v352
    %v355 = vunpack.c.l.s4 1966171168
    %v356 = vunpack.c.0.s8 %v355
    %v357 = vlaneseq
    %v358 = vshrl.u32 %v357, 7
    %v359 = vsub.s32 %v356, %v358
    %v360 = vrot.slane %v353, %v359
    %v362 = vadd.f32 %v50, %v360
    %v363 = vlaneseq
    %vm364 = vcmp.ge.s32.totalorder %v363, 0
    %vm365 = vcmp.lt.s32.totalorder %v363, 512
    %vm366 = vmand %vm364, %vm365
    %367 = vst.msk [vmem:[#allocation2] sm:$0xf] %vm366, %v362
    // Predicated region
    $region26: #{tpu_custom_call.1} parent=1 // pred_check
      %p368 = pneg %p41
    $region27: #{tpu_custom_call.1} parent=1 // pred_check_branch
      %370 = sbr.rel (%p368) target = $region29
    $region28: #{tpu_custom_call.1} parent=1 // pred_region
      %v371 = vld [vmem:[#allocation2] sm:$0xf]
      %v372 = vld [vmem:[%s2] sm:$0xf]
      %v373 = vsub.f32 %v371, %v372
      %v374 = vmul.f32 %v373, %v373
      %v376 = vlaneseq
      %v377 = vshrl.u32 %v376, 7
      %v378 = vsub.s32 0, %v377
      %v379 = vrot.slane %v374, %v378
      %v380 = vlaneseq
      %v381 = vshrl.u32 %v380, 7
      %v382 = vsub.s32 1, %v381
      %v383 = vrot.slane %v374, %v382
      %v384 = vlaneseq
      %v385 = vshrl.u32 %v384, 7
      %v386 = vsub.s32 2, %v385
      %v387 = vrot.slane %v374, %v386
      %v388 = vlaneseq
      %v389 = vshrl.u32 %v388, 7
      %v390 = vsub.s32 3, %v389
      %v391 = vrot.slane %v374, %v390
      %vm396 = vcmask 1040384
      %v397 = vsel %vm396, %v379, 0.0
      %v398 = vsel %vm396, %v383, 0.0
      %v399 = vadd.f32 %v397, %v398
      %v400 = vsel %vm396, %v387, 0.0
      %v401 = vadd.f32 %v399, %v400
      %v402 = vsel %vm396, %v391, 0.0
      %v403 = vadd.f32 %v401, %v402
      %404 = vadd.xlane.f32.xlu0 %v403
      %v405 = vpop.xlane.xlu0 %404
      %v406 = vrot.slane %v405, 4
      %v407 = vadd.f32 %v405, %v406
      %v408 = vrot.slane %v407, 2
      %v409 = vadd.f32 %v407, %v408
      %v410 = vrot.slane %v409, 1
      %v411 = vadd.f32 %v409, %v410
      %s412 = vtos %v411
      %v413 = vstv %s412
      %414 = vst [vmem:[#allocation8] sm:$0xff] %v413
    $region29: #{tpu_custom_call.1} parent=1 // pred_fallthru
      _
    // Predicated region
    $region30: #{tpu_custom_call.1} parent=1 // pred_check
      _
    $region31: #{tpu_custom_call.1} parent=1 // pred_check_branch
      %416 = sbr.rel (0) target = $region33
    $region32: #{tpu_custom_call.1} parent=1 // pred_region
      %s418 = ssub.s32 128, 128
      %419 = vsyncadd [#allocation5], %s418
      %s421 = sshll.u32 [#allocation8], 4
      %s422 = int_to_ptr.vmem [resolvable:$true] %s421
      %424 = dma.vmem_to_hbm [thread:$0]  %s422, 128, %s3, [#allocation5]
    $region33: #{tpu_custom_call.1} parent=1 // pred_fallthru
      _
    // Predicated region
    $region34: #{tpu_custom_call.1} parent=1 // pred_check
      _
    $region35: #{tpu_custom_call.1} parent=1 // pred_check_branch
      %426 = sbr.rel (0) target = $region37
    $region36: #{tpu_custom_call.1} parent=1 // pred_region
      %427 = dma.done [#allocation5], 128
    $region37: #{tpu_custom_call.1} parent=1 // pred_fallthru
      _
    %428 = vsyncpa [#allocation4], 1
    %429 = vsyncpa [#allocation7], 1
    %430 = vsyncpa [#allocation5], 1

</llo_original>
